<compile_context>
chip_gen: v7x
topology: tpu7x:2x2x1
jax: 0.10.0
libtpu: 0.0.40
codegen_flags: <defaults>
</compile_context>

<pallas_src>
import functools

import jax
import jax.numpy as jnp
from jax.experimental import pallas as pl
from jax.experimental.pallas import tpu as pltpu


def _critic_kernel(obs_ref, act_ref, w1o_ref, w1a_ref, w2_ref, w3_ref,
                   b_ref, q_ref, *, use_bf16):
    """Fused two-head critic MLP.

    obs_ref: [TB, F]   f32
    act_ref: [TB, A]   f32
    w1o_ref: [F, 2H]   layer-1 weight, obs rows   (heads concat on out dim)
    w1a_ref: [A, 2H]   layer-1 weight, action rows
    w2_ref:  [2H, 2H]  block-diagonal -> heads stay independent
    w3_ref:  [2H, 2]   block-diagonal -> col 0 = q1, col 1 = q2
    b_ref:   [3, 2H]   f32 (row 0 = b1, row 1 = b2, row 2 = b3 zero-padded)
    q_ref:   [TB, 2]   f32
    """
    b = b_ref[...]
    b1 = b[0:1, :]
    b2 = b[1:2, :]
    b3 = b[2:3, 0:2]

    def mm(a, w):
        # bf16 MXU operands with f32 accumulation; bias-add / ReLU stay in
        # f32 (v5e has no bf16 VPU/EUP datapath).
        if use_bf16:
            a = a.astype(jnp.bfloat16)
        return jnp.dot(a, w, preferred_element_type=jnp.float32)

    # Layer 1: split matmul replaces concat([obs, act]) @ W1.
    h = mm(obs_ref[...], w1o_ref[...]) + mm(act_ref[...], w1a_ref[...]) + b1
    h = jnp.maximum(h, 0.0)                                  # [TB, 2H] f32
    h = jnp.maximum(mm(h, w2_ref[...]) + b2, 0.0)            # [TB, 2H] f32
    q_ref[...] = mm(h, w3_ref[...]) + b3                     # [TB, 2]  f32


def make_qfunction_params(key, obs_dim, action_dim, hidden_dim):
    """Matches QFunction.__init__ + weight_init_conv:
       Linear weights orthogonal, biases zero."""
    k1, k2, k3 = jax.random.split(key, 3)
    in_dim = obs_dim + action_dim
    ortho = jax.nn.initializers.orthogonal()
    # PyTorch Linear stores W as (out, in); kernel computes x @ W.T.
    w1 = ortho(k1, (hidden_dim, in_dim), jnp.float32).T      # [in_dim, H]
    w2 = ortho(k2, (hidden_dim, hidden_dim), jnp.float32).T  # [H, H]
    w3 = ortho(k3, (1, hidden_dim), jnp.float32).T           # [H, 1]
    return {
        "w1": w1, "b1": jnp.zeros((1, hidden_dim), jnp.float32),
        "w2": w2, "b2": jnp.zeros((1, hidden_dim), jnp.float32),
        "w3": w3, "b3": jnp.zeros((1, 1), jnp.float32),
    }


def pack_critic_params(params, obs_dim, *, use_bf16=False):
    """Fuse both Q-heads into block-diagonal weights + one packed bias array.

    Done once, outside the hot path.  Off-diagonal blocks are exactly zero,
    so the two heads remain mathematically independent.  The layer-1 weight
    is split into obs rows / action rows so the kernel can consume obs and
    action without a wrapper-side concatenate.
    """
    p1, p2 = params["q1"], params["q2"]
    h = p1["w2"].shape[0]
    w1 = jnp.concatenate([p1["w1"], p2["w1"]], axis=1)        # [F+A, 2H]
    w1o, w1a = w1[:obs_dim, :], w1[obs_dim:, :]               # [F,2H] [A,2H]
    w2 = jax.scipy.linalg.block_diag(p1["w2"], p2["w2"])      # [2H, 2H]
    w3 = jax.scipy.linalg.block_diag(p1["w3"], p2["w3"])      # [2H, 2]
    b1 = jnp.concatenate([p1["b1"], p2["b1"]], axis=1)        # [1, 2H]
    b2 = jnp.concatenate([p1["b2"], p2["b2"]], axis=1)        # [1, 2H]
    b3 = jnp.concatenate([p1["b3"], p2["b3"]], axis=1)        # [1, 2]
    b3 = jnp.pad(b3, ((0, 0), (0, 2 * h - 2)))                # [1, 2H]
    biases = jnp.concatenate([b1, b2, b3], axis=0)            # [3, 2H], f32
    wdt = jnp.bfloat16 if use_bf16 else jnp.float32
    return {
        "w1o": w1o.astype(wdt), "w1a": w1a.astype(wdt),
        "w2": w2.astype(wdt), "w3": w3.astype(wdt),
        "b": biases.astype(jnp.float32), "use_bf16": use_bf16,
    }


def critic_forward(obs_feat, action, packed, *, tile_b=512):
    """obs_feat: [B, F] (encoder output), action: [B, A].

    Returns (q1 [B, 1], q2 [B, 1]) — same semantics as Critic.forward with
    an identity encoder.
    """
    obs_feat = obs_feat.astype(jnp.float32)
    action = action.astype(jnp.float32)
    b_rows, f = obs_feat.shape
    a_dim = action.shape[1]
    w1o, w1a, w2, w3, bias = (packed["w1o"], packed["w1a"], packed["w2"],
                              packed["w3"], packed["b"])
    kernel = functools.partial(_critic_kernel, use_bf16=packed["use_bf16"])

    if b_rows <= tile_b:
        # Tiny batch: grid-less call, whole arrays as single VMEM blocks.
        # One DMA per operand; one [B, 2] store.
        q = pl.pallas_call(
            kernel,
            out_shape=jax.ShapeDtypeStruct((b_rows, 2), jnp.float32),
        )(obs_feat, action, w1o, w1a, w2, w3, bias)
    else:
        # Large batch: stream activations over a batch grid; the (tiny)
        # weights stay VMEM-resident via constant index_maps.  Non-divisible
        # last tile is masked by Pallas (no wrapper-side pad/copy).
        # "parallel" lets v7x shard the batch axis across its two TCs.
        # VMEM footprint (double-buffered obs/act + out tiles + weights) is
        # well under v7x's 64 MiB for these shapes.
        nb = pl.cdiv(b_rows, tile_b)
        q = pl.pallas_call(
            kernel,
            out_shape=jax.ShapeDtypeStruct((b_rows, 2), jnp.float32),
            grid=(nb,),
            in_specs=[
                pl.BlockSpec((tile_b, f), lambda i: (i, 0)),
                pl.BlockSpec((tile_b, a_dim), lambda i: (i, 0)),
                pl.BlockSpec(w1o.shape, lambda i: (0, 0)),
                pl.BlockSpec(w1a.shape, lambda i: (0, 0)),
                pl.BlockSpec(w2.shape, lambda i: (0, 0)),
                pl.BlockSpec(w3.shape, lambda i: (0, 0)),
                pl.BlockSpec(bias.shape, lambda i: (0, 0)),
            ],
            out_specs=pl.BlockSpec((tile_b, 2), lambda i: (i, 0)),
            compiler_params=pltpu.CompilerParams(
                dimension_semantics=("parallel",)),
        )(obs_feat, action, w1o, w1a, w2, w3, bias)
    return q[:, 0:1], q[:, 1:2]


if __name__ == "__main__":
    # Small shapes consistent with the module.
    B = 8                      # batch
    encoder_feature_dim = 32   # F (output of encoder)
    action_dim = 4             # action_shape[0]
    hidden_dim = 32            # H

    key = jax.random.PRNGKey(0)
    k_obs, k_act, k_q1, k_q2 = jax.random.split(key, 4)

    obs_feat = jax.random.normal(k_obs, (B, encoder_feature_dim), jnp.float32)
    action = jax.random.normal(k_act, (B, action_dim), jnp.float32)

    params = {
        "q1": make_qfunction_params(k_q1, encoder_feature_dim, action_dim,
                                    hidden_dim),
        "q2": make_qfunction_params(k_q2, encoder_feature_dim, action_dim,
                                    hidden_dim),
    }

    # Reference (plain JAX, same math as the PyTorch module).
    def ref_q(xa, p):
        h = jnp.maximum(xa @ p["w1"] + p["b1"], 0.0)
        h = jnp.maximum(h @ p["w2"] + p["b2"], 0.0)
        return h @ p["w3"] + p["b3"]

    # 1) Small batch, f32, grid-less fused kernel.
    packed = pack_critic_params(params, encoder_feature_dim, use_bf16=False)
    q1, q2 = critic_forward(obs_feat, action, packed)
    jax.block_until_ready((q1, q2))

    xa = jnp.concatenate([obs_feat, action], axis=1)
    r1, r2 = ref_q(xa, params["q1"]), ref_q(xa, params["q2"])
    assert q1.shape == (B, 1) and q2.shape == (B, 1)
    assert jnp.allclose(q1, r1, atol=1e-5), "q1 mismatch (f32 small path)"
    assert jnp.allclose(q2, r2, atol=1e-5), "q2 mismatch (f32 small path)"

    # 2) Larger batch (not a multiple of the tile -> exercises the masked
    #    partial last block), f32 gridded path: must match exactly.
    B_big = 1000
    kb1, kb2 = jax.random.split(jax.random.PRNGKey(1))
    obs_big = jax.random.normal(kb1, (B_big, encoder_feature_dim),
                                jnp.float32)
    act_big = jax.random.normal(kb2, (B_big, action_dim), jnp.float32)

    q1g, q2g = critic_forward(obs_big, act_big, packed, tile_b=512)
    jax.block_until_ready((q1g, q2g))

    xab = jnp.concatenate([obs_big, act_big], axis=1)
    r1b, r2b = ref_q(xab, params["q1"]), ref_q(xab, params["q2"])
    assert q1g.shape == (B_big, 1) and q2g.shape == (B_big, 1)
    assert jnp.allclose(q1g, r1b, atol=1e-5), "q1 mismatch (f32 grid path)"
    assert jnp.allclose(q2g, r2b, atol=1e-5), "q2 mismatch (f32 grid path)"

    # 3) Same large batch with bf16 matmul operands (f32 accumulation).
    packed_bf16 = pack_critic_params(params, encoder_feature_dim,
                                     use_bf16=True)
    q1b, q2b = critic_forward(obs_big, act_big, packed_bf16, tile_b=512)
    jax.block_until_ready((q1b, q2b))

    assert jnp.allclose(q1b, r1b, atol=2e-1, rtol=5e-2), "q1 mismatch (bf16)"
    assert jnp.allclose(q2b, r2b, atol=2e-1, rtol=5e-2), "q2 mismatch (bf16)"

    print("KERNEL_OK")
</pallas_src>

<mosaic_0001>
module attributes {stable_mosaic.version = 11 : i64} {
  func.func @_critic_kernel(%arg0: memref<8x32xf32, #tpu.memory_space<vmem>>, %arg1: memref<8x4xf32, #tpu.memory_space<vmem>>, %arg2: memref<32x64xf32, #tpu.memory_space<vmem>>, %arg3: memref<4x64xf32, #tpu.memory_space<vmem>>, %arg4: memref<64x64xf32, #tpu.memory_space<vmem>>, %arg5: memref<64x2xf32, #tpu.memory_space<vmem>>, %arg6: memref<3x64xf32, #tpu.memory_space<vmem>>, %arg7: memref<8x2xf32, #tpu.memory_space<vmem>>) attributes {dimension_semantics = [], scalar_prefetch = 0 : i64, scratch_operands = 0 : i64, tpu.core_type = #tpu.core_type<tc>} {
    %c0 = arith.constant 0 : index
    %c0_0 = arith.constant 0 : index
    %0 = vector.load %arg6[%c0, %c0_0] : memref<3x64xf32, #tpu.memory_space<vmem>>, vector<3x64xf32>
    %1 = vector.extract_strided_slice %0 {offsets = [0, 0], sizes = [1, 64], strides = [1, 1]} : vector<3x64xf32> to vector<1x64xf32>
    %2 = vector.extract_strided_slice %0 {offsets = [1, 0], sizes = [1, 64], strides = [1, 1]} : vector<3x64xf32> to vector<1x64xf32>
    %3 = vector.extract_strided_slice %0 {offsets = [2, 0], sizes = [1, 2], strides = [1, 1]} : vector<3x64xf32> to vector<1x2xf32>
    %c0_1 = arith.constant 0 : index
    %c0_2 = arith.constant 0 : index
    %4 = vector.load %arg0[%c0_1, %c0_2] : memref<8x32xf32, #tpu.memory_space<vmem>>, vector<8x32xf32>
    %c0_3 = arith.constant 0 : index
    %c0_4 = arith.constant 0 : index
    %5 = vector.load %arg2[%c0_3, %c0_4] : memref<32x64xf32, #tpu.memory_space<vmem>>, vector<32x64xf32>
    %cst = arith.constant dense<0.000000e+00> : vector<8x64xf32>
    %6 = tpu.matmul %4, %5, %cst {dimension_numbers = #tpu.dot_dimension_numbers<[1], [0], [0], [1], [0, 0, 1, 1], [], []>} : vector<8x32xf32>, vector<32x64xf32>, vector<8x64xf32> -> vector<8x64xf32>
    %c0_5 = arith.constant 0 : index
    %c0_6 = arith.constant 0 : index
    %7 = vector.load %arg1[%c0_5, %c0_6] : memref<8x4xf32, #tpu.memory_space<vmem>>, vector<8x4xf32>
    %c0_7 = arith.constant 0 : index
    %c0_8 = arith.constant 0 : index
    %8 = vector.load %arg3[%c0_7, %c0_8] : memref<4x64xf32, #tpu.memory_space<vmem>>, vector<4x64xf32>
    %cst_9 = arith.constant dense<0.000000e+00> : vector<8x64xf32>
    %9 = tpu.matmul %7, %8, %cst_9 {dimension_numbers = #tpu.dot_dimension_numbers<[1], [0], [0], [1], [0, 0, 1, 1], [], []>} : vector<8x4xf32>, vector<4x64xf32>, vector<8x64xf32> -> vector<8x64xf32>
    %10 = arith.addf %6, %9 : vector<8x64xf32>
    %11 = vector.broadcast %1 : vector<1x64xf32> to vector<8x64xf32>
    %12 = arith.addf %10, %11 : vector<8x64xf32>
    %cst_10 = arith.constant 0.000000e+00 : f32
    %13 = vector.broadcast %cst_10 : f32 to vector<8x64xf32>
    %14 = arith.maximumf %12, %13 : vector<8x64xf32>
    %c0_11 = arith.constant 0 : index
    %c0_12 = arith.constant 0 : index
    %15 = vector.load %arg4[%c0_11, %c0_12] : memref<64x64xf32, #tpu.memory_space<vmem>>, vector<64x64xf32>
    %cst_13 = arith.constant dense<0.000000e+00> : vector<8x64xf32>
    %16 = tpu.matmul %14, %15, %cst_13 {dimension_numbers = #tpu.dot_dimension_numbers<[1], [0], [0], [1], [0, 0, 1, 1], [], []>} : vector<8x64xf32>, vector<64x64xf32>, vector<8x64xf32> -> vector<8x64xf32>
    %17 = vector.broadcast %2 : vector<1x64xf32> to vector<8x64xf32>
    %18 = arith.addf %16, %17 : vector<8x64xf32>
    %cst_14 = arith.constant 0.000000e+00 : f32
    %19 = vector.broadcast %cst_14 : f32 to vector<8x64xf32>
    %20 = arith.maximumf %18, %19 : vector<8x64xf32>
    %c0_15 = arith.constant 0 : index
    %c0_16 = arith.constant 0 : index
    %21 = vector.load %arg5[%c0_15, %c0_16] : memref<64x2xf32, #tpu.memory_space<vmem>>, vector<64x2xf32>
    %cst_17 = arith.constant dense<0.000000e+00> : vector<8x2xf32>
    %22 = tpu.matmul %20, %21, %cst_17 {dimension_numbers = #tpu.dot_dimension_numbers<[1], [0], [0], [1], [0, 0, 1, 1], [], []>} : vector<8x64xf32>, vector<64x2xf32>, vector<8x2xf32> -> vector<8x2xf32>
    %23 = vector.broadcast %3 : vector<1x2xf32> to vector<8x2xf32>
    %24 = arith.addf %22, %23 : vector<8x2xf32>
    %c0_18 = arith.constant 0 : index
    %c0_19 = arith.constant 0 : index
    %25 = vector.load %arg7[%c0_18, %c0_19] : memref<8x2xf32, #tpu.memory_space<vmem>>, vector<8x2xf32>
    tpu.vector_store %arg7[%c0_18, %c0_19], %24 {strides = array<i32>} : memref<8x2xf32, #tpu.memory_space<vmem>>, vector<8x2xf32>,
    return
  }
}

</mosaic_0001>

<llo_original>
// kernel: tpu_custom_call.1
$region0: #{tpu_custom_call.1}
  #allocation0 [shape = 'u32[]', space=smem, size = 0x4, offset = 0x4, fixed_abs, tag = 'smem constant byte address 0x4 - core index']
  #allocation1 [shape = 'u32[144,128]{1,0:T(1,128)}', space=vmem, size = 0x12000, scoped, tag = 'internal scratch']
  %s0 = inlined_call_operand.vmem [shape: f32[8,32], index: 0, kind: input, shape index: {}]
  %s1 = inlined_call_operand.vmem [shape: f32[8,4], index: 1, kind: input, shape index: {}]
  %s2 = inlined_call_operand.hbm [shape: f32[32,64], index: 2, kind: input, shape index: {}]
  %s3 = inlined_call_operand.vmem [shape: f32[4,64], index: 3, kind: input, shape index: {}]
  %s4 = inlined_call_operand.vmem [shape: f32[64,64], index: 4, kind: input, shape index: {}]
  %s5 = inlined_call_operand.vmem [shape: f32[64,2], index: 5, kind: input, shape index: {}]
  %s6 = inlined_call_operand.vmem [shape: f32[3,64], index: 6, kind: input, shape index: {}]
  %s7 = inlined_call_operand.vmem [shape: f32[8,2], index: 7, kind: output, shape index: {}]
  %s8 = sld [smem:[#allocation0]]
  $region42: #{tpu_custom_call.1} parent=0
    _
  %s10 = ssub.s32 1, %s8
  %s11 = scalar_select 0, %s10, %s8
  $region1: #{tpu_custom_call.1} parent=0
    #allocation2 [shape = 'u8[16384]{0}', space=vmem, size = 0x4000, scoped, tag = 'input window, operand 2, single buffered']
    #allocation3 [shape = 's32[1]{0}', space=sflag, size = 0x4, scoped, tag = 'scoped memory for tpu_custom_call.1']
    %12 = vsyncpa [#allocation3], 0
    // Predicated region
    $region2: #{tpu_custom_call.1} parent=1 // pred_check
      _
    $region3: #{tpu_custom_call.1} parent=1 // pred_check_branch
      %14 = sbr.rel (0) target = $region5
    $region4: #{tpu_custom_call.1} parent=1 // pred_region
      _
    $region5: #{tpu_custom_call.1} parent=1 // pred_fallthru
      _
    // Predicated region
    $region6: #{tpu_custom_call.1} parent=1 // pred_check
      _
    $region7: #{tpu_custom_call.1} parent=1 // pred_check_branch
      %16 = sbr.rel (0) target = $region9
    $region8: #{tpu_custom_call.1} parent=1 // pred_region
      _
    $region9: #{tpu_custom_call.1} parent=1 // pred_fallthru
      _
    // Predicated region
    $region10: #{tpu_custom_call.1} parent=1 // pred_check
      _
    $region11: #{tpu_custom_call.1} parent=1 // pred_check_branch
      %18 = sbr.rel (0) target = $region13
    $region12: #{tpu_custom_call.1} parent=1 // pred_region
      %s20 = ssub.s32 512, 512
      %21 = vsyncadd [#allocation3], %s20
      %s22 = sshll.u32 [#allocation2], 4
      %s23 = int_to_ptr.vmem [resolvable:$true] %s22
      %28 = dma.hbm_to_vmem [thread:$0]  %s2, 512, %s23, [#allocation3], 128, 128, 8
    $region13: #{tpu_custom_call.1} parent=1 // pred_fallthru
      _
    // Predicated region
    $region14: #{tpu_custom_call.1} parent=1 // pred_check
      _
    $region15: #{tpu_custom_call.1} parent=1 // pred_check_branch
      %30 = sbr.rel (0) target = $region17
    $region16: #{tpu_custom_call.1} parent=1 // pred_region
      _
    $region17: #{tpu_custom_call.1} parent=1 // pred_fallthru
      _
    // Predicated region
    $region18: #{tpu_custom_call.1} parent=1 // pred_check
      _
    $region19: #{tpu_custom_call.1} parent=1 // pred_check_branch
      %32 = sbr.rel (0) target = $region21
    $region20: #{tpu_custom_call.1} parent=1 // pred_region
      _
    $region21: #{tpu_custom_call.1} parent=1 // pred_fallthru
      _
    // Predicated region
    $region22: #{tpu_custom_call.1} parent=1 // pred_check
      _
    $region23: #{tpu_custom_call.1} parent=1 // pred_check_branch
      %34 = sbr.rel (0) target = $region25
    $region24: #{tpu_custom_call.1} parent=1 // pred_region
      _
    $region25: #{tpu_custom_call.1} parent=1 // pred_fallthru
      _
    // Predicated region
    $region26: #{tpu_custom_call.1} parent=1 // pred_check
      _
    $region27: #{tpu_custom_call.1} parent=1 // pred_check_branch
      %36 = sbr.rel (0) target = $region29
    $region28: #{tpu_custom_call.1} parent=1 // pred_region
      _
    $region29: #{tpu_custom_call.1} parent=1 // pred_fallthru
      _
    // Predicated region
    $region30: #{tpu_custom_call.1} parent=1 // pred_check
      _
    $region31: #{tpu_custom_call.1} parent=1 // pred_check_branch
      %38 = sbr.rel (0) target = $region33
    $region32: #{tpu_custom_call.1} parent=1 // pred_region
      %39 = dma.done [#allocation3], 512
    $region33: #{tpu_custom_call.1} parent=1 // pred_fallthru
      _
    %v40 = vld [vmem:[%s6] sm:$0x7]
    %v41 = vld [vmem:[%s0] sm:$0xff]
    %v42 = vld [vmem:[#allocation2] sm:$0xff]
    %v43 = vld [vmem:[#allocation2 + $0x8] sm:$0xff]
    %v44 = vld [vmem:[#allocation2 + $0x10] sm:$0xff]
    %v45 = vld [vmem:[#allocation2 + $0x18] sm:$0xff]
    %v46 = vld [vmem:[%s1] sm:$0xff]
    %v47 = vld [vmem:[%s3] sm:$0xf]
    %vm48 = vcmask 31744
    %v50 = vsel %vm48, %v46, 0
    %vm52 = vcmask 1043456
    %v54 = vsel %vm52, %v47, 0
    %56 = vmatprep.subr.mxu0 0.0
    %57 = vmatpush1.msra.mxu0 %v54
    %58 = vmatprep.subr.mxu0 0.0
    %59 = vmatpush1.msra.mxu0 0.0
    %60 = vmatprep.subr.mxu0 0.0
    %61 = vmatpush1.msra.mxu0 0.0
    %62 = vmatprep.subr.mxu0 0.0
    %63 = vmatpush1.msra.mxu0 0.0
    %64 = vmatprep.subr.mxu0 0.0
    %65 = vmatpush1.msra.mxu0 0.0
    %66 = vmatprep.subr.mxu0 0.0
    %67 = vmatpush1.msra.mxu0 0.0
    %68 = vmatprep.subr.mxu0 0.0
    %69 = vmatpush1.msra.mxu0 0.0
    %70 = vmatprep.subr.mxu0 0.0
    %71 = vmatpush1.msra.mxu0 0.0
    %72 = vmatprep.subr.mxu0 0.0
    %73 = vmatpush1.msra.mxu0 0.0
    %74 = vmatprep.subr.mxu0 0.0
    %75 = vmatpush1.msra.mxu0 0.0
    %76 = vmatprep.subr.mxu0 0.0
    %77 = vmatpush1.msra.mxu0 0.0
    %78 = vmatprep.subr.mxu0 0.0
    %79 = vmatpush1.msra.mxu0 0.0
    %80 = vmatprep.subr.mxu0 0.0
    %81 = vmatpush1.msra.mxu0 0.0
    %82 = vmatprep.subr.mxu0 0.0
    %83 = vmatpush1.msra.mxu0 0.0
    %84 = vmatprep.subr.mxu0 0.0
    %85 = vmatpush1.msra.mxu0 0.0
    %86 = vmatprep.subr.mxu0 0.0
    %87 = vmatpush1.msra.mxu0 0.0
    %88 = vmatprep.subr.mxu0 0.0
    %89 = vmatpush1.msra.mxu0 0.0
    %90 = vmatprep.subr.mxu0 0.0
    %91 = vmatpush1.msra.mxu0 0.0
    %92 = vmatprep.subr.mxu0 0.0
    %93 = vmatpush1.msra.mxu0 0.0
    %94 = vmatprep.subr.mxu0 0.0
    %95 = vmatpush1.msra.mxu0 0.0
    %96 = vmatprep.subr.mxu0 0.0
    %97 = vmatpush1.msra.mxu0 0.0
    %98 = vmatprep.subr.mxu0 0.0
    %99 = vmatpush1.msra.mxu0 0.0
    %100 = vmatprep.subr.mxu0 0.0
    %101 = vmatpush1.msra.mxu0 0.0
    %102 = vmatprep.subr.mxu0 0.0
    %103 = vmatpush1.msra.mxu0 0.0
    %104 = vmatprep.subr.mxu0 0.0
    %105 = vmatpush1.msra.mxu0 0.0
    %106 = vmatprep.subr.mxu0 0.0
    %107 = vmatpush1.msra.mxu0 0.0
    %108 = vmatprep.subr.mxu0 0.0
    %109 = vmatpush1.msra.mxu0 0.0
    %110 = vmatprep.subr.mxu0 0.0
    %111 = vmatpush1.msra.mxu0 0.0
    %112 = vmatprep.subr.mxu0 0.0
    %113 = vmatpush1.msra.mxu0 0.0
    %114 = vmatprep.subr.mxu0 0.0
    %115 = vmatpush1.msra.mxu0 0.0
    %116 = vmatprep.subr.mxu0 0.0
    %117 = vmatpush1.msra.mxu0 0.0
    %118 = vmatprep.subr.mxu0 0.0
    %119 = vmatpush1.msra.mxu0 0.0
    %120 = vmatprep.mubr.f32.mxu0 0.0
    %121 = vmatmul.mubr.f32.gmra.mrb[0].mxu0 %v50
    %v122 = vpop.f32.mrb[0].mxu0
    %v123 = vadd.f32 0.0, %v122
    %v124 = vpop.f32.mrb[0].mxu0
    %125 = vdwg.mxu0
    %vm126 = vcmask 261120
    %v128 = vsel %vm126, %v41, 0
    %130 = vmatprep.subr.mxu0 0.0
    %131 = vmatpush1.msra.mxu0 %v42
    %132 = vmatprep.subr.mxu0 0.0
    %133 = vmatpush1.msra.mxu0 %v43
    %134 = vmatprep.subr.mxu0 0.0
    %135 = vmatpush1.msra.mxu0 %v44
    %136 = vmatprep.subr.mxu0 0.0
    %137 = vmatpush1.msra.mxu0 %v45
    %138 = vmatprep.subr.mxu0 0.0
    %139 = vmatpush1.msra.mxu0 0.0
    %140 = vmatprep.subr.mxu0 0.0
    %141 = vmatpush1.msra.mxu0 0.0
    %142 = vmatprep.subr.mxu0 0.0
    %143 = vmatpush1.msra.mxu0 0.0
    %144 = vmatprep.subr.mxu0 0.0
    %145 = vmatpush1.msra.mxu0 0.0
    %146 = vmatprep.subr.mxu0 0.0
    %147 = vmatpush1.msra.mxu0 0.0
    %148 = vmatprep.subr.mxu0 0.0
    %149 = vmatpush1.msra.mxu0 0.0
    %150 = vmatprep.subr.mxu0 0.0
    %151 = vmatpush1.msra.mxu0 0.0
    %152 = vmatprep.subr.mxu0 0.0
    %153 = vmatpush1.msra.mxu0 0.0
    %154 = vmatprep.subr.mxu0 0.0
    %155 = vmatpush1.msra.mxu0 0.0
    %156 = vmatprep.subr.mxu0 0.0
    %157 = vmatpush1.msra.mxu0 0.0
    %158 = vmatprep.subr.mxu0 0.0
    %159 = vmatpush1.msra.mxu0 0.0
    %160 = vmatprep.subr.mxu0 0.0
    %161 = vmatpush1.msra.mxu0 0.0
    %162 = vmatprep.subr.mxu0 0.0
    %163 = vmatpush1.msra.mxu0 0.0
    %164 = vmatprep.subr.mxu0 0.0
    %165 = vmatpush1.msra.mxu0 0.0
    %166 = vmatprep.subr.mxu0 0.0
    %167 = vmatpush1.msra.mxu0 0.0
    %168 = vmatprep.subr.mxu0 0.0
    %169 = vmatpush1.msra.mxu0 0.0
    %170 = vmatprep.subr.mxu0 0.0
    %171 = vmatpush1.msra.mxu0 0.0
    %172 = vmatprep.subr.mxu0 0.0
    %173 = vmatpush1.msra.mxu0 0.0
    %174 = vmatprep.subr.mxu0 0.0
    %175 = vmatpush1.msra.mxu0 0.0
    %176 = vmatprep.subr.mxu0 0.0
    %177 = vmatpush1.msra.mxu0 0.0
    %178 = vmatprep.subr.mxu0 0.0
    %179 = vmatpush1.msra.mxu0 0.0
    %180 = vmatprep.subr.mxu0 0.0
    %181 = vmatpush1.msra.mxu0 0.0
    %182 = vmatprep.subr.mxu0 0.0
    %183 = vmatpush1.msra.mxu0 0.0
    %184 = vmatprep.subr.mxu0 0.0
    %185 = vmatpush1.msra.mxu0 0.0
    %186 = vmatprep.subr.mxu0 0.0
    %187 = vmatpush1.msra.mxu0 0.0
    %188 = vmatprep.subr.mxu0 0.0
    %189 = vmatpush1.msra.mxu0 0.0
    %190 = vmatprep.subr.mxu0 0.0
    %191 = vmatpush1.msra.mxu0 0.0
    %192 = vmatprep.subr.mxu0 0.0
    %193 = vmatpush1.msra.mxu0 0.0
    %194 = vmatprep.mubr.f32.mxu0 0.0
    %195 = vmatmul.mubr.f32.gmra.mrb[0].mxu0 %v128
    %v196 = vpop.f32.mrb[0].mxu0
    %v197 = vadd.f32 %v123, %v196
    %v198 = vpop.f32.mrb[0].mxu0
    %199 = vdwg.mxu0
    %v200 = vlaneseq
    %v201 = vshrl.u32 %v200, 7
    %v202 = vsub.s32 0, %v201
    %v203 = vrot.slane %v40, %v202
    %v204 = vadd.f32 %v197, %v203
    %v205 = vmax.f32 %v204, 0.0
    %v206 = vld [vmem:[%s4] sm:$0xff]
    %v207 = vld [vmem:[%s4 + $0x8] sm:$0xff]
    %v208 = vld [vmem:[%s4 + $0x10] sm:$0xff]
    %v209 = vld [vmem:[%s4 + $0x18] sm:$0xff]
    %v210 = vld [vmem:[%s4 + $0x20] sm:$0xff]
    %v211 = vld [vmem:[%s4 + $0x28] sm:$0xff]
    %v212 = vld [vmem:[%s4 + $0x30] sm:$0xff]
    %v213 = vld [vmem:[%s4 + $0x38] sm:$0xff]
    %v214 = vlaneseq
    %v215 = vshrl.u32 %v214, 7
    %v216 = vsub.s32 1, %v215
    %v217 = vrot.slane %v40, %v216
    %vm218 = vcmask 523264
    %v220 = vsel %vm218, %v205, 0
    %222 = vmatprep.subr.mxu0 0.0
    %223 = vmatpush1.msra.mxu0 %v206
    %224 = vmatprep.subr.mxu0 0.0
    %225 = vmatpush1.msra.mxu0 %v207
    %226 = vmatprep.subr.mxu0 0.0
    %227 = vmatpush1.msra.mxu0 %v208
    %228 = vmatprep.subr.mxu0 0.0
    %229 = vmatpush1.msra.mxu0 %v209
    %230 = vmatprep.subr.mxu0 0.0
    %231 = vmatpush1.msra.mxu0 %v210
    %232 = vmatprep.subr.mxu0 0.0
    %233 = vmatpush1.msra.mxu0 %v211
    %234 = vmatprep.subr.mxu0 0.0
    %235 = vmatpush1.msra.mxu0 %v212
    %236 = vmatprep.subr.mxu0 0.0
    %237 = vmatpush1.msra.mxu0 %v213
    %238 = vmatprep.subr.mxu0 0.0
    %239 = vmatpush1.msra.mxu0 0.0
    %240 = vmatprep.subr.mxu0 0.0
    %241 = vmatpush1.msra.mxu0 0.0
    %242 = vmatprep.subr.mxu0 0.0
    %243 = vmatpush1.msra.mxu0 0.0
    %244 = vmatprep.subr.mxu0 0.0
    %245 = vmatpush1.msra.mxu0 0.0
    %246 = vmatprep.subr.mxu0 0.0
    %247 = vmatpush1.msra.mxu0 0.0
    %248 = vmatprep.subr.mxu0 0.0
    %249 = vmatpush1.msra.mxu0 0.0
    %250 = vmatprep.subr.mxu0 0.0
    %251 = vmatpush1.msra.mxu0 0.0
    %252 = vmatprep.subr.mxu0 0.0
    %253 = vmatpush1.msra.mxu0 0.0
    %254 = vmatprep.subr.mxu0 0.0
    %255 = vmatpush1.msra.mxu0 0.0
    %256 = vmatprep.subr.mxu0 0.0
    %257 = vmatpush1.msra.mxu0 0.0
    %258 = vmatprep.subr.mxu0 0.0
    %259 = vmatpush1.msra.mxu0 0.0
    %260 = vmatprep.subr.mxu0 0.0
    %261 = vmatpush1.msra.mxu0 0.0
    %262 = vmatprep.subr.mxu0 0.0
    %263 = vmatpush1.msra.mxu0 0.0
    %264 = vmatprep.subr.mxu0 0.0
    %265 = vmatpush1.msra.mxu0 0.0
    %266 = vmatprep.subr.mxu0 0.0
    %267 = vmatpush1.msra.mxu0 0.0
    %268 = vmatprep.subr.mxu0 0.0
    %269 = vmatpush1.msra.mxu0 0.0
    %270 = vmatprep.subr.mxu0 0.0
    %271 = vmatpush1.msra.mxu0 0.0
    %272 = vmatprep.subr.mxu0 0.0
    %273 = vmatpush1.msra.mxu0 0.0
    %274 = vmatprep.subr.mxu0 0.0
    %275 = vmatpush1.msra.mxu0 0.0
    %276 = vmatprep.subr.mxu0 0.0
    %277 = vmatpush1.msra.mxu0 0.0
    %278 = vmatprep.subr.mxu0 0.0
    %279 = vmatpush1.msra.mxu0 0.0
    %280 = vmatprep.subr.mxu0 0.0
    %281 = vmatpush1.msra.mxu0 0.0
    %282 = vmatprep.subr.mxu0 0.0
    %283 = vmatpush1.msra.mxu0 0.0
    %284 = vmatprep.subr.mxu0 0.0
    %285 = vmatpush1.msra.mxu0 0.0
    %286 = vmatprep.mubr.f32.mxu0 0.0
    %287 = vmatmul.mubr.f32.gmra.mrb[0].mxu0 %v220
    %v288 = vpop.f32.mrb[0].mxu0
    %v289 = vadd.f32 %v217, %v288
    %v290 = vpop.f32.mrb[0].mxu0
    %291 = vdwg.mxu0
    %v292 = vmax.f32 %v289, 0.0
    %v293 = vld [vmem:[%s5] sm:$0xff]
    %v294 = vld [vmem:[%s5 + $0x8] sm:$0xff]
    %v295 = vld [vmem:[%s5 + $0x10] sm:$0xff]
    %v296 = vld [vmem:[%s5 + $0x18] sm:$0xff]
    %v297 = vld [vmem:[%s5 + $0x20] sm:$0xff]
    %v298 = vld [vmem:[%s5 + $0x28] sm:$0xff]
    %v299 = vld [vmem:[%s5 + $0x30] sm:$0xff]
    %v300 = vld [vmem:[%s5 + $0x38] sm:$0xff]
    %v301 = vlaneseq
    %v302 = vshrl.u32 %v301, 7
    %v303 = vsub.s32 2, %v302
    %v304 = vrot.slane %v40, %v303
    %v306 = vsel %vm218, %v292, 0
    %308 = vmatprep.subr.mxu0 0.0
    %309 = vmatpush1.msra.mxu0 %v293
    %310 = vmatprep.subr.mxu0 0.0
    %311 = vmatpush1.msra.mxu0 %v294
    %312 = vmatprep.subr.mxu0 0.0
    %313 = vmatpush1.msra.mxu0 %v295
    %314 = vmatprep.subr.mxu0 0.0
    %315 = vmatpush1.msra.mxu0 %v296
    %316 = vmatprep.subr.mxu0 0.0
    %317 = vmatpush1.msra.mxu0 %v297
    %318 = vmatprep.subr.mxu0 0.0
    %319 = vmatpush1.msra.mxu0 %v298
    %320 = vmatprep.subr.mxu0 0.0
    %321 = vmatpush1.msra.mxu0 %v299
    %322 = vmatprep.subr.mxu0 0.0
    %323 = vmatpush1.msra.mxu0 %v300
    %324 = vmatprep.subr.mxu0 0.0
    %325 = vmatpush1.msra.mxu0 0.0
    %326 = vmatprep.subr.mxu0 0.0
    %327 = vmatpush1.msra.mxu0 0.0
    %328 = vmatprep.subr.mxu0 0.0
    %329 = vmatpush1.msra.mxu0 0.0
    %330 = vmatprep.subr.mxu0 0.0
    %331 = vmatpush1.msra.mxu0 0.0
    %332 = vmatprep.subr.mxu0 0.0
    %333 = vmatpush1.msra.mxu0 0.0
    %334 = vmatprep.subr.mxu0 0.0
    %335 = vmatpush1.msra.mxu0 0.0
    %336 = vmatprep.subr.mxu0 0.0
    %337 = vmatpush1.msra.mxu0 0.0
    %338 = vmatprep.subr.mxu0 0.0
    %339 = vmatpush1.msra.mxu0 0.0
    %340 = vmatprep.subr.mxu0 0.0
    %341 = vmatpush1.msra.mxu0 0.0
    %342 = vmatprep.subr.mxu0 0.0
    %343 = vmatpush1.msra.mxu0 0.0
    %344 = vmatprep.subr.mxu0 0.0
    %345 = vmatpush1.msra.mxu0 0.0
    %346 = vmatprep.subr.mxu0 0.0
    %347 = vmatpush1.msra.mxu0 0.0
    %348 = vmatprep.subr.mxu0 0.0
    %349 = vmatpush1.msra.mxu0 0.0
    %350 = vmatprep.subr.mxu0 0.0
    %351 = vmatpush1.msra.mxu0 0.0
    %352 = vmatprep.subr.mxu0 0.0
    %353 = vmatpush1.msra.mxu0 0.0
    %354 = vmatprep.subr.mxu0 0.0
    %355 = vmatpush1.msra.mxu0 0.0
    %356 = vmatprep.subr.mxu0 0.0
    %357 = vmatpush1.msra.mxu0 0.0
    %358 = vmatprep.subr.mxu0 0.0
    %359 = vmatpush1.msra.mxu0 0.0
    %360 = vmatprep.subr.mxu0 0.0
    %361 = vmatpush1.msra.mxu0 0.0
    %362 = vmatprep.subr.mxu0 0.0
    %363 = vmatpush1.msra.mxu0 0.0
    %364 = vmatprep.subr.mxu0 0.0
    %365 = vmatpush1.msra.mxu0 0.0
    %366 = vmatprep.subr.mxu0 0.0
    %367 = vmatpush1.msra.mxu0 0.0
    %368 = vmatprep.subr.mxu0 0.0
    %369 = vmatpush1.msra.mxu0 0.0
    %370 = vmatprep.subr.mxu0 0.0
    %371 = vmatpush1.msra.mxu0 0.0
    %372 = vmatprep.mubr.f32.mxu0 0.0
    %373 = vmatmul.mubr.f32.gmra.mrb[0].mxu0 %v306
    %v374 = vpop.f32.mrb[0].mxu0
    %v375 = vadd.f32 %v304, %v374
    %v376 = vpop.f32.mrb[0].mxu0
    %377 = vdwg.mxu0
    %vm378 = vcmask 15360
    %379 = vst.msk [vmem:[%s7] sm:$0xff] %vm378, %v375
    // Predicated region
    $region34: #{tpu_custom_call.1} parent=1 // pred_check
      _
    $region35: #{tpu_custom_call.1} parent=1 // pred_check_branch
      %381 = sbr.rel (0) target = $region37
    $region36: #{tpu_custom_call.1} parent=1 // pred_region
      _
    $region37: #{tpu_custom_call.1} parent=1 // pred_fallthru
      _
    // Predicated region
    $region38: #{tpu_custom_call.1} parent=1 // pred_check
      _
    $region39: #{tpu_custom_call.1} parent=1 // pred_check_branch
      %383 = sbr.rel (0) target = $region41
    $region40: #{tpu_custom_call.1} parent=1 // pred_region
      _
    $region41: #{tpu_custom_call.1} parent=1 // pred_fallthru
      _
    %384 = vsyncpa [#allocation3], 1

</llo_original>
